<compile_context>
chip_gen: v5e
topology: v5e:2x2
jax: 0.10.0
libtpu: 0.0.40
codegen_flags: <defaults>
</compile_context>

<pallas_src>
import math

import jax
import jax.numpy as jnp
import numpy as np
from jax.experimental import pallas as pl
from jax.experimental.pallas import tpu as pltpu


def _cdiv(a, b):
    return (a + b - 1) // b


def _round_up(x, m):
    return _cdiv(x, m) * m


def _vmem_capacity_bytes():
    """Physical VMEM per TensorCore; conservative (v7x-sized) fallback."""
    try:
        info = pltpu.get_tpu_info()
        cap = getattr(info, "vmem_capacity_bytes", None)
        if cap:
            return int(cap)
    except Exception:
        pass
    return 64 * 1024 * 1024


def _embedding_bag_kernel(coef_ref, w_ref, o_ref):
    # grid = (bag_blocks, reduction_blocks); reduction axis is last.
    # The resident output block is the accumulator (same block index for every k).
    @pl.when(pl.program_id(1) == 0)
    def _():
        o_ref[...] = jnp.zeros_like(o_ref)

    # bf16 streams, f32 accumulate on the MXU.  All scaling (mean divisor,
    # sqrt(d_model), max_norm renorm) is already folded into coef on the host.
    o_ref[...] += jnp.dot(coef_ref[...], w_ref[...],
                          preferred_element_type=jnp.float32)


def user_embeddings_forward(indices, offsets, weight, *, max_norm, padding_idx,
                            vmem_budget_bytes=None):
    """indices: (L,) int32, offsets: (B,) int32 (sorted, offsets[0]==0),
    weight: (V, D) f32  ->  (B, D) f32."""
    V, D = weight.shape
    B = offsets.shape[0]
    L = indices.shape[0]

    # ---------------- host/XLA glue: O(L) + O(L*D), no (B, V) materialization ----------
    pos = jnp.arange(L, dtype=jnp.int32)
    bag_id = (jnp.searchsorted(offsets, pos, side="right") - 1).astype(jnp.int32)
    valid = (indices != padding_idx).astype(jnp.float32)                  # (L,)
    denom = jnp.zeros((B,), jnp.float32).at[bag_id].add(valid)            # (B,)
    # per-position coefficient: 'mean' divisor and sqrt(d_model) folded in.
    coef = valid * (math.sqrt(D) / jnp.maximum(denom, 1.0))[bag_id]       # (L,)

    # Gather the looked-up rows once (O(L*D)) and fold the max_norm renorm into coef
    # so the kernel does no renorm work at all.
    w_rows = weight[indices]                                              # (L, D) f32
    sumsq = jnp.sum(w_rows * w_rows, axis=-1)                             # (L,)
    rscale = jnp.minimum(1.0, max_norm * jax.lax.rsqrt(sumsq + 1e-30))
    coef = coef * rscale                                                  # (L,)

    # ---------------- tiling -----------------------------------------------------------
    # Bag axis: keep a single sublane-dense resident block when it fits; otherwise tile
    # at 256 (multiple of 128 -> full MXU rows on v5e, lane/sublane-dense stores).
    B_pad8 = _round_up(B, 8)
    if B_pad8 <= 512:
        tb = B_pad8
        B_pad = B_pad8
    else:
        tb = 256
        B_pad = _round_up(B, tb)

    cap = _vmem_capacity_bytes()
    if vmem_budget_bytes is None:
        # ~48 MiB on v7x (64 MiB VMEM), ~96 MiB on v5e/v6e (128 MiB VMEM).
        vmem_budget_bytes = min((cap * 3) // 4, 96 << 20)
    else:
        vmem_budget_bytes = min(int(vmem_budget_bytes), (cap * 3) // 4)

    # Reduction axis = one column per lookup position, padded to the 128-lane grain.
    L128 = _round_up(max(L, 1), 128)
    bytes_out = 2 * tb * D * 4                       # double-buffered f32 output block
    per_tl = 3 * (D + tb) * 2                        # triple-buffered bf16 streams (worst case)
    tl_max = max(128, ((vmem_budget_bytes - bytes_out) // per_tl) // 128 * 128)
    nk = _cdiv(L128, min(tl_max, L128))
    tl = _round_up(_cdiv(L128, nk), 128)
    Lp = tl * nk

    # ---------------- padded bf16 operands ---------------------------------------------
    coefs = jnp.zeros((B_pad, Lp), jnp.float32).at[bag_id, pos].add(coef)
    coefs = coefs.astype(jnp.bfloat16)                                    # (B_pad, Lp)
    if Lp > L:
        w_rows = jnp.pad(w_rows, ((0, Lp - L), (0, 0)))
    w_bf16 = w_rows.astype(jnp.bfloat16)                                  # (Lp, D)

    used = bytes_out + per_tl * tl
    vmem_limit = int(min(cap, max(32 << 20, used + (8 << 20))))

    # Deeper pipelining on the row stream only when there are many short reduction steps.
    n_k = Lp // tl
    if n_k > 8:
        w_spec = pl.BlockSpec((tl, D), lambda b, k: (k, 0),
                              pipeline_mode=pl.Buffered(3))
    else:
        w_spec = pl.BlockSpec((tl, D), lambda b, k: (k, 0))

    out = pl.pallas_call(
        _embedding_bag_kernel,
        out_shape=jax.ShapeDtypeStruct((B_pad, D), jnp.float32),
        grid_spec=pltpu.PrefetchScalarGridSpec(
            num_scalar_prefetch=0,
            grid=(B_pad // tb, n_k),
            in_specs=[pl.BlockSpec((tb, tl), lambda b, k: (b, k)),
                      w_spec],
            out_specs=pl.BlockSpec((tb, D), lambda b, k: (b, 0)),
        ),
        # Bag axis is a single block unless B is very large; when it is tiled, the
        # (B, Lp) coefficient stream dominates, so "parallel" sharding of the bag axis
        # splits that stream rather than duplicating the small gathered-row stream.
        compiler_params=pltpu.CompilerParams(
            dimension_semantics=("parallel", "arbitrary"),
            vmem_limit_bytes=vmem_limit),
    )(coefs, w_bf16)
    return out[:B]


def _reference(indices, offsets, weight, max_norm, padding_idx, d_model):
    """Pure-numpy reference for EmbeddingBag(mode='mean', max_norm, padding_idx)."""
    w = np.asarray(weight)
    norm = np.linalg.norm(w, axis=-1, keepdims=True)
    wr = np.where(norm > max_norm, w * max_norm / np.maximum(norm, 1e-30), w)
    idx = np.asarray(indices)
    off = np.asarray(offsets)
    L = idx.shape[0]
    B = off.shape[0]
    ends = np.concatenate([off[1:], np.array([L])])
    outs = []
    for b in range(B):
        bag = idx[off[b]:ends[b]]
        bag = bag[bag != padding_idx]
        if bag.size == 0:
            outs.append(np.zeros((w.shape[1],), np.float32))
        else:
            outs.append(wr[bag].mean(axis=0).astype(np.float32))
    return np.stack(outs) * math.sqrt(d_model)


if __name__ == "__main__":
    vocab_size = 256
    d_model = 128
    max_norm = 1.0
    padding_idx = 0
    B = 8     # number of bags
    L = 32    # total flat index length

    key = jax.random.PRNGKey(0)
    k_w, k_i = jax.random.split(key)

    # deterministic parameter init (nn.EmbeddingBag: N(0,1), padding row zeroed)
    weight = jax.random.normal(k_w, (vocab_size, d_model), dtype=jnp.float32)
    weight = weight.at[padding_idx].set(0.0)

    # x = (indices, offsets)  --  mirrors forward(x): x[0]=input, x[1]=offsets
    indices = jax.random.randint(k_i, (L,), 0, vocab_size, dtype=jnp.int32)
    offsets = jnp.arange(0, L, L // B, dtype=jnp.int32)   # (B,)

    out = user_embeddings_forward(indices, offsets, weight,
                                  max_norm=max_norm, padding_idx=padding_idx)
    out = jax.block_until_ready(out)

    ref = _reference(indices, offsets, weight, max_norm, padding_idx, d_model)
    # bf16 input streams (f32 accumulate) -> bf16-level tolerance.
    np.testing.assert_allclose(np.asarray(out), ref, rtol=3e-2, atol=3e-2)

    print("KERNEL_OK")
</pallas_src>

<mosaic_0001>
module attributes {stable_mosaic.version = 11 : i64} {
  func.func @_embedding_bag_kernel(%arg0: i32, %arg1: i32, %arg2: memref<8x128xbf16, #tpu.memory_space<vmem>>, %arg3: memref<128x128xbf16, #tpu.memory_space<vmem>>, %arg4: memref<8x128xf32, #tpu.memory_space<vmem>>) attributes {dimension_semantics = [#tpu.dimension_semantics<parallel>, #tpu.dimension_semantics<arbitrary>], iteration_bounds = array<i64: 1, 1>, scalar_prefetch = 0 : i64, scratch_operands = 0 : i64, tpu.core_type = #tpu.core_type<tc>, window_params = [{transform_indices = @transform_0, window_bounds = array<i64: 8, 128>}, {transform_indices = @transform_1, window_bounds = array<i64: 128, 128>}, {transform_indices = @transform_2, window_bounds = array<i64: 8, 128>}]} {
    %c0_i32 = arith.constant 0 : i32
    %0 = arith.cmpi eq, %arg1, %c0_i32 : i32
    %1 = arith.extui %0 : i1 to i32
    %c0_i32_0 = arith.constant 0 : i32
    %2 = arith.cmpi ne, %1, %c0_i32_0 : i32
    scf.if %2 {
      %cst_8 = arith.constant 0.000000e+00 : f32
      %9 = vector.broadcast %cst_8 : f32 to vector<8x128xf32>
      %c0_9 = arith.constant 0 : index
      %c0_10 = arith.constant 0 : index
      %10 = vector.load %arg4[%c0_9, %c0_10] : memref<8x128xf32, #tpu.memory_space<vmem>>, vector<8x128xf32>
      tpu.vector_store %arg4[%c0_9, %c0_10], %9 {strides = array<i32>} : memref<8x128xf32, #tpu.memory_space<vmem>>, vector<8x128xf32>,
    } else {
    }
    %c0 = arith.constant 0 : index
    %c0_1 = arith.constant 0 : index
    %3 = vector.load %arg4[%c0, %c0_1] : memref<8x128xf32, #tpu.memory_space<vmem>>, vector<8x128xf32>
    %c0_2 = arith.constant 0 : index
    %c0_3 = arith.constant 0 : index
    %4 = vector.load %arg2[%c0_2, %c0_3] : memref<8x128xbf16, #tpu.memory_space<vmem>>, vector<8x128xbf16>
    %c0_4 = arith.constant 0 : index
    %c0_5 = arith.constant 0 : index
    %5 = vector.load %arg3[%c0_4, %c0_5] : memref<128x128xbf16, #tpu.memory_space<vmem>>, vector<128x128xbf16>
    %cst = arith.constant dense<0.000000e+00> : vector<8x128xf32>
    %6 = tpu.matmul %4, %5, %cst {dimension_numbers = #tpu.dot_dimension_numbers<[1], [0], [0], [1], [0, 0, 1, 1], [], []>} : vector<8x128xbf16>, vector<128x128xbf16>, vector<8x128xf32> -> vector<8x128xf32>
    %7 = arith.addf %3, %6 : vector<8x128xf32>
    %c0_6 = arith.constant 0 : index
    %c0_7 = arith.constant 0 : index
    %8 = vector.load %arg4[%c0_6, %c0_7] : memref<8x128xf32, #tpu.memory_space<vmem>>, vector<8x128xf32>
    tpu.vector_store %arg4[%c0_6, %c0_7], %7 {strides = array<i32>} : memref<8x128xf32, #tpu.memory_space<vmem>>, vector<8x128xf32>,
    return
  }
  func.func @transform_0(%arg0: i32, %arg1: i32) -> (i32, i32) {
    %c0_i32 = arith.constant 0 : i32
    return %arg0, %arg1 : i32, i32
  }
  func.func @transform_1(%arg0: i32, %arg1: i32) -> (i32, i32) {
    %c0_i32 = arith.constant 0 : i32
    %c0_i32_0 = arith.constant 0 : i32
    return %arg1, %c0_i32 : i32, i32
  }
  func.func @transform_2(%arg0: i32, %arg1: i32) -> (i32, i32) {
    %c0_i32 = arith.constant 0 : i32
    %c0_i32_0 = arith.constant 0 : i32
    return %arg0, %c0_i32 : i32, i32
  }
}

</mosaic_0001>

<llo_original>
// kernel: tpu_custom_call.1
$region0: #{tpu_custom_call.1}
  #allocation0 [shape = 'u32[]', space=smem, size = 0x4, offset = 0x4, fixed_abs, tag = 'smem constant byte address 0x4 - core index']
  #allocation1 [shape = 'u32[72,128]{1,0:T(1,128)}', space=vmem, size = 0x9000, scoped, tag = 'internal scratch']
  %s0 = inlined_call_operand.hbm [shape: bf16[8,128], index: 0, kind: input, shape index: {}]
  %s1 = inlined_call_operand.hbm [shape: bf16[128,128], index: 1, kind: input, shape index: {}]
  %s2 = inlined_call_operand.hbm [shape: f32[8,128], index: 2, kind: output, shape index: {}]
  %s3 = sld [smem:[#allocation0]]
  $region30: #{tpu_custom_call.1} parent=0
    _
  %s5 = ssub.s32 1, %s3
  %s6 = scalar_select 0, %s5, %s3
  $region1: #{tpu_custom_call.1} parent=0
    #allocation2 [shape = 'u8[2048]{0}', space=vmem, size = 0x800, scoped, tag = 'input window, operand 0, single buffered']
    #allocation3 [shape = 's32[1]{0}', space=sflag, size = 0x4, scoped, tag = 'scoped memory for tpu_custom_call.1']
    #allocation4 [shape = 's32[1]{0}', space=sflag, size = 0x4, scoped, tag = 'scoped memory for tpu_custom_call.1']
    #allocation5 [shape = 'u8[32768]{0}', space=vmem, size = 0x8000, scoped, tag = 'input window, operand 1, single buffered']
    #allocation6 [shape = 's32[1]{0}', space=sflag, size = 0x4, scoped, tag = 'scoped memory for tpu_custom_call.1']
    #allocation7 [shape = 'u8[4096]{0}', space=vmem, size = 0x1000, scoped, tag = 'output window, operand 0, single buffered']
    %7 = vsyncpa [#allocation3], 0
    %8 = vsyncpa [#allocation6], 0
    %9 = vsyncpa [#allocation4], 0
    // Predicated region
    $region2: #{tpu_custom_call.1} parent=1 // pred_check
      _
    $region3: #{tpu_custom_call.1} parent=1 // pred_check_branch
      %11 = sbr.rel (0) target = $region5
    $region4: #{tpu_custom_call.1} parent=1 // pred_region
      %13 = vsyncadd [#allocation3], 0
      %s15 = sshll.u32 %s0, 4
      %s16 = int_to_ptr.hbm [resolvable:$true] %s15
      %s17 = sshll.u32 [#allocation2], 4
      %s18 = int_to_ptr.vmem [resolvable:$true] %s17
      %20 = dma.hbm_to_vmem [thread:$0]  %s16, 64, %s18, [#allocation3]
    $region5: #{tpu_custom_call.1} parent=1 // pred_fallthru
      _
    // Predicated region
    $region6: #{tpu_custom_call.1} parent=1 // pred_check
      _
    $region7: #{tpu_custom_call.1} parent=1 // pred_check_branch
      %22 = sbr.rel (0) target = $region9
    $region8: #{tpu_custom_call.1} parent=1 // pred_region
      %24 = vsyncadd [#allocation6], 0
      %s25 = sshll.u32 %s1, 4
      %s26 = int_to_ptr.hbm [resolvable:$true] %s25
      %s27 = sshll.u32 [#allocation5], 4
      %s28 = int_to_ptr.vmem [resolvable:$true] %s27
      %33 = dma.hbm_to_vmem [thread:$0]  %s26, 1024, %s28, [#allocation6], 64, 64, 4
    $region9: #{tpu_custom_call.1} parent=1 // pred_fallthru
      _
    // Predicated region
    $region10: #{tpu_custom_call.1} parent=1 // pred_check
      _
    $region11: #{tpu_custom_call.1} parent=1 // pred_check_branch
      %35 = sbr.rel (0) target = $region13
    $region12: #{tpu_custom_call.1} parent=1 // pred_region
      %37 = dma.done [#allocation3], 64
    $region13: #{tpu_custom_call.1} parent=1 // pred_fallthru
      _
    // Predicated region
    $region14: #{tpu_custom_call.1} parent=1 // pred_check
      _
    $region15: #{tpu_custom_call.1} parent=1 // pred_check_branch
      %39 = sbr.rel (0) target = $region17
    $region16: #{tpu_custom_call.1} parent=1 // pred_region
      %41 = dma.done [#allocation6], 1024
    $region17: #{tpu_custom_call.1} parent=1 // pred_fallthru
      _
    %p42 = scmp.eq.s32.totalorder 0, 0
    // Predicated region
    $region18: #{tpu_custom_call.1} parent=1 // pred_check
      %p43 = pneg %p42
    $region19: #{tpu_custom_call.1} parent=1 // pred_check_branch
      %45 = sbr.rel (%p43) target = $region21
    $region20: #{tpu_custom_call.1} parent=1 // pred_region
      %46 = vst [vmem:[#allocation7] sm:$0xff] 0.0
    $region21: #{tpu_custom_call.1} parent=1 // pred_fallthru
      _
    %v47 = vld [vmem:[#allocation7] sm:$0xff]
    %v48 = vld [vmem:[#allocation2] sm:$0xf]
    %v49 = vld [vmem:[#allocation5] sm:$0xf]
    %v50 = vld [vmem:[#allocation5 + $0x4] sm:$0xf]
    %v51 = vld [vmem:[#allocation5 + $0x8] sm:$0xf]
    %v52 = vld [vmem:[#allocation5 + $0xc] sm:$0xf]
    %v53 = vld [vmem:[#allocation5 + $0x10] sm:$0xf]
    %v54 = vld [vmem:[#allocation5 + $0x14] sm:$0xf]
    %v55 = vld [vmem:[#allocation5 + $0x18] sm:$0xf]
    %v56 = vld [vmem:[#allocation5 + $0x1c] sm:$0xf]
    %v57 = vld [vmem:[#allocation5 + $0x20] sm:$0xf]
    %v58 = vld [vmem:[#allocation5 + $0x24] sm:$0xf]
    %v59 = vld [vmem:[#allocation5 + $0x28] sm:$0xf]
    %v60 = vld [vmem:[#allocation5 + $0x2c] sm:$0xf]
    %v61 = vld [vmem:[#allocation5 + $0x30] sm:$0xf]
    %v62 = vld [vmem:[#allocation5 + $0x34] sm:$0xf]
    %v63 = vld [vmem:[#allocation5 + $0x38] sm:$0xf]
    %v64 = vld [vmem:[#allocation5 + $0x3c] sm:$0xf]
    %v81 = vunpack.c.l.b16 %v49
    %v82 = vunpack.c.l.b16 %v50
    %v83 = vunpack.c.l.b16 %v51
    %v84 = vunpack.c.l.b16 %v52
    %v85 = vunpack.c.l.b16 %v53
    %v86 = vunpack.c.l.b16 %v54
    %v87 = vunpack.c.l.b16 %v55
    %v88 = vunpack.c.l.b16 %v56
    %v89 = vunpack.c.l.b16 %v57
    %v90 = vunpack.c.l.b16 %v58
    %v91 = vunpack.c.l.b16 %v59
    %v92 = vunpack.c.l.b16 %v60
    %v93 = vunpack.c.l.b16 %v61
    %v94 = vunpack.c.l.b16 %v62
    %v95 = vunpack.c.l.b16 %v63
    %v96 = vunpack.c.l.b16 %v64
    %v97 = vpack.c.b16 %v82, %v81
    %v98 = vpack.c.b16 %v84, %v83
    %v99 = vpack.c.b16 %v86, %v85
    %v100 = vpack.c.b16 %v88, %v87
    %v101 = vpack.c.b16 %v90, %v89
    %v102 = vpack.c.b16 %v92, %v91
    %v103 = vpack.c.b16 %v94, %v93
    %v104 = vpack.c.b16 %v96, %v95
    %113 = vmatpush.bf16.msra.mxu0 %v104
    %114 = vmatpush.bf16.msra.mxu0 %v103
    %115 = vmatpush.bf16.msra.mxu0 %v102
    %116 = vmatpush.bf16.msra.mxu0 %v101
    %117 = vmatpush.bf16.msra.mxu0 %v100
    %118 = vmatpush.bf16.msra.mxu0 %v99
    %119 = vmatpush.bf16.msra.mxu0 %v98
    %120 = vmatpush.bf16.msra.mxu0 %v97
    %121 = vmatmul.bf16.gmra.mxu0 %v48
    %v122 = vpop.f32.mrf.mxu0
    %v123 = vadd.f32 0.0, %v122
    %v124 = vpop.f32.mrf.mxu0
    %125 = vdwg.mxu0
    %v126 = vadd.f32 %v47, %v123
    %127 = vst [vmem:[#allocation7] sm:$0xff] %v126
    // Predicated region
    $region22: #{tpu_custom_call.1} parent=1 // pred_check
      _
    $region23: #{tpu_custom_call.1} parent=1 // pred_check_branch
      %129 = sbr.rel (0) target = $region25
    $region24: #{tpu_custom_call.1} parent=1 // pred_region
      %131 = vsyncadd [#allocation4], 0
      %s133 = sshll.u32 [#allocation7], 4
      %s134 = int_to_ptr.vmem [resolvable:$true] %s133
      %s135 = sshll.u32 %s2, 4
      %s136 = int_to_ptr.hbm [resolvable:$true] %s135
      %138 = dma.vmem_to_hbm [thread:$0]  %s134, 128, %s136, [#allocation4]
    $region25: #{tpu_custom_call.1} parent=1 // pred_fallthru
      _
    // Predicated region
    $region26: #{tpu_custom_call.1} parent=1 // pred_check
      _
    $region27: #{tpu_custom_call.1} parent=1 // pred_check_branch
      %140 = sbr.rel (0) target = $region29
    $region28: #{tpu_custom_call.1} parent=1 // pred_region
      %142 = dma.done [#allocation4], 128
    $region29: #{tpu_custom_call.1} parent=1 // pred_fallthru
      _
    %143 = vsyncpa [#allocation3], 1
    %144 = vsyncpa [#allocation6], 1
    %145 = vsyncpa [#allocation4], 1

</llo_original>
